<compile_context>
chip_gen: v7x
topology: tpu7x:2x2x1
jax: 0.10.0
libtpu: 0.0.40
codegen_flags: <defaults>
</compile_context>

<pallas_src>
import functools

import jax
import jax.numpy as jnp
from jax import lax
from jax.experimental import pallas as pl
from jax.experimental.pallas import tpu as pltpu

_LANE = 128
_CHUNK_ROWS = 2048               # rows per in-kernel chunk (f32 temp ~1 MiB)
_SMALL_INPUT_BYTES = 1 << 20     # below this, plain-JAX fast path


def _round_up(x, m):
    return ((x + m - 1) // m) * m


def _generation_budget():
    """Returns (input-buffer byte budget, vmem_limit_bytes) per TPU generation."""
    try:
        kind = jax.devices()[0].device_kind.lower()
    except Exception:  # pragma: no cover - backend query failure
        kind = ""
    if ("v6" in kind) or ("v7" in kind):
        # v6e (128 MiB VMEM) / v7x (64 MiB): 2 inputs x 2 pipeline buffers up to
        # 32 MiB of input buffering; 48 MiB scoped limit stays under v7x's 64.
        return 32 * 1024 * 1024, 48 * 1024 * 1024
    # v5e and older / unknown: ~820 GB/s HBM, per-step overhead already small;
    # keep tiles modest and leave scoped-VMEM headroom.
    return 16 * 1024 * 1024, 32 * 1024 * 1024


def _sq_diff_kernel(p_ref, t_ref, out_ref, *, block_rows, chunk_rows,
                    blocks_per_split, rows, num_blocks, ragged, clamped):
    s = pl.program_id(0)            # 2-way split (TensorCore shard on v7x)
    i = pl.program_id(1)            # sequential blocks within the split
    g = s * blocks_per_split + i    # global block index

    nchunks = block_rows // chunk_rows

    @pl.when(i == 0)
    def _():
        out_ref[...] = jnp.zeros_like(out_ref)

    def _fold_sq(d):
        sq = d * d
        # Fold the chunk to one vreg (pure VALU adds; layout-preserving view).
        # TODO(synk): if a v7x/bf16 trace shows VALU saturation, move this fold
        # onto the (idle) MXU via jnp.dot(ones((8, chunk_rows)), sq).
        out_ref[...] += sq.reshape(chunk_rows // 8, 8, _LANE).sum(axis=0)

    def _chunk_diff(c):
        off = pl.multiple_of(c * chunk_rows, chunk_rows)
        # Upcast on the vreg: HBM traffic stays at native dtype width.
        p = p_ref[pl.ds(off, chunk_rows), :].astype(jnp.float32)
        t = t_ref[pl.ds(off, chunk_rows), :].astype(jnp.float32)
        return p - t

    def _accumulate_full():
        # Unmasked steady-state path, chunked so temporaries stay ~1 MiB.
        def body(c, carry):
            _fold_sq(_chunk_diff(c))
            return carry
        lax.fori_loop(0, nchunks, body, 0)

    def _accumulate_tail():
        # Only the single ragged tail block pays the mask VALU chain.
        base = (num_blocks - 1) * block_rows
        def body(c, carry):
            d = _chunk_diff(c)
            row = lax.broadcasted_iota(jnp.int32, (chunk_rows, _LANE), 0)
            global_row = base + c * chunk_rows + row
            # Mask BEFORE squaring/summing: the OOB part of the tail block is
            # uninitialized VMEM and must contribute exactly 0.
            _fold_sq(jnp.where(global_row < rows, d, 0.0))
            return carry
        lax.fori_loop(0, nchunks, body, 0)

    if not (ragged or clamped):
        # No edge blocks at all: no predicates, no masks.
        _accumulate_full()
        return

    # Blocks with g < full_limit are full and in range: unmasked fast path.
    full_limit = num_blocks - 1 if ragged else num_blocks

    @pl.when(g < full_limit)
    def _():
        _accumulate_full()

    if ragged:
        @pl.when(g == num_blocks - 1)
        def _():
            _accumulate_tail()
    # Overshoot blocks (g >= num_blocks, only when 'clamped') fall through and
    # contribute nothing.


def _sq_diff_sum_pallas_impl(pred, target):
    """Sum of squared differences over all elements, computed with Pallas."""
    n = pred.size
    p = pred.reshape(-1)
    t = target.reshape(-1)

    # Rare path: lane-align the element count (zero pads contribute 0).
    if n % _LANE:
        pad = _LANE - n % _LANE
        p = jnp.pad(p, (0, pad))
        t = jnp.pad(t, (0, pad))
    rows = p.size // _LANE
    p2 = p.reshape(rows, _LANE)
    t2 = t.reshape(rows, _LANE)

    item_p = jnp.dtype(pred.dtype).itemsize
    item_t = jnp.dtype(target.dtype).itemsize
    # Sublane packing granularity of the narrowest streamed dtype
    # (f32 -> 8, bf16 -> 16, int8/fp8 -> 32).
    sub = max(8, 32 // max(1, min(item_p, item_t)))

    input_budget, vmem_limit = _generation_budget()
    # 2 pipeline buffers per input, both inputs resident at once.
    max_rows = input_budget // (2 * _LANE * (item_p + item_t))
    max_rows = max(sub, (max_rows // sub) * sub)
    block_rows = min(max_rows, _round_up(rows, sub))

    # In-kernel chunking keeps elementwise temporaries small.
    chunk_rows = min(block_rows, _CHUNK_ROWS)
    if block_rows % chunk_rows:
        chunk_rows = block_rows   # small/odd block: single chunk

    num_blocks = pl.cdiv(rows, block_rows)
    # Two-way split across TensorCores (v7x megacore); elsewhere it is simply a
    # sequential loop over the same blocks.
    nsplit = 2 if num_blocks >= 2 else 1
    blocks_per_split = pl.cdiv(num_blocks, nsplit)
    clamped = nsplit * blocks_per_split > num_blocks
    ragged = (rows % block_rows) != 0

    if clamped:
        def in_map(s, i):
            return (jnp.minimum(s * blocks_per_split + i, num_blocks - 1), 0)
    else:
        def in_map(s, i):
            return (s * blocks_per_split + i, 0)

    kernel = functools.partial(
        _sq_diff_kernel,
        block_rows=block_rows,
        chunk_rows=chunk_rows,
        blocks_per_split=blocks_per_split,
        rows=rows,
        num_blocks=num_blocks,
        ragged=ragged,
        clamped=clamped,
    )

    cost = pl.CostEstimate(
        flops=3 * n,                                   # sub + mul + add
        transcendentals=0,
        bytes_accessed=n * (item_p + item_t) + nsplit * 8 * _LANE * 4,
    )

    partials = pl.pallas_call(
        kernel,
        out_shape=jax.ShapeDtypeStruct((nsplit * 8, _LANE), jnp.float32),
        grid_spec=pltpu.PrefetchScalarGridSpec(
            num_scalar_prefetch=0,
            grid=(nsplit, blocks_per_split),
            in_specs=[
                pl.BlockSpec((block_rows, _LANE), in_map),   # pred tile
                pl.BlockSpec((block_rows, _LANE), in_map),   # target tile
            ],
            # Output block index depends only on the parallel axis -> stays
            # resident in VMEM across the reduction axis (accumulator pattern).
            out_specs=pl.BlockSpec((8, _LANE), lambda s, i: (s, 0)),
        ),
        compiler_params=pltpu.CompilerParams(
            # TODO(synk): verify on a v7x trace that the nsplit axis shards
            # across both TensorCores; otherwise use pltpu.CORE_PARALLEL.
            dimension_semantics=("parallel", "arbitrary"),
            vmem_limit_bytes=vmem_limit,
        ),
        cost_estimate=cost,
    )(p2, t2)

    return jnp.sum(partials)


# --- differentiable wrapper around the Pallas reduction --------------------

@jax.custom_vjp
def _pallas_sq_diff_sum(pred, target):
    return _sq_diff_sum_pallas_impl(pred, target)


def _pallas_sq_diff_sum_fwd(pred, target):
    return _sq_diff_sum_pallas_impl(pred, target), (pred, target)


def _pallas_sq_diff_sum_bwd(res, g):
    # d/dpred sum((p-t)^2) = 2*(p-t); backward is a trivial streaming op, keep
    # it in plain JAX (memory-bound either way).
    pred, target = res
    d = (pred.astype(jnp.float32) - target.astype(jnp.float32)) * (2.0 * g)
    return d.astype(pred.dtype), (-d).astype(target.dtype)


_pallas_sq_diff_sum.defvjp(_pallas_sq_diff_sum_fwd, _pallas_sq_diff_sum_bwd)


def _sq_diff_sum(pred, target, use_pallas=None):
    if use_pallas is None:
        streamed = (pred.size * jnp.dtype(pred.dtype).itemsize
                    + target.size * jnp.dtype(target.dtype).itemsize)
        use_pallas = streamed >= _SMALL_INPUT_BYTES
    if not use_pallas:
        # Tiny inputs: pallas_call launch + the separate partials reduce would
        # dominate; plain JAX is faster and exactly equivalent.
        d = pred.astype(jnp.float32) - target.astype(jnp.float32)
        return jnp.sum(d * d)
    return _pallas_sq_diff_sum(pred, target)


def vqvae_loss_forward(pred, target, latent, vq_loss, use_pallas=None):
    """Jittable forward: returns (total, dict of 0-d f32 arrays)."""
    del latent  # unused in the PyTorch forward as well
    n = pred.size
    sq_sum = _sq_diff_sum(pred, target, use_pallas=use_pallas)
    mse = sq_sum * jnp.float32(1.0 / n)
    vq = jnp.asarray(vq_loss, jnp.float32)
    total = mse + vq
    # TODO(synk): PyTorch returns Python floats via .item(); we keep JAX 0-d
    # arrays so the loss stays jittable (and differentiable via custom_vjp).
    return total, {'mse': mse, 'vq_loss': vq, 'total': total}


class VQVAELoss:
    """JAX/Pallas port of the PyTorch VQVAELoss module."""

    def __init__(self, commitment_cost=0.25):
        self.commitment_cost = commitment_cost  # unused in forward (as in PyTorch)
        self._fn = jax.jit(vqvae_loss_forward, static_argnames=("use_pallas",))

    def __call__(self, pred, target, latent, vq_loss, use_pallas=None):
        return self._fn(pred, target, latent, vq_loss, use_pallas=use_pallas)


if __name__ == "__main__":
    key = jax.random.PRNGKey(0)
    k1, k2, k3, k4 = jax.random.split(key, 4)

    # Small shapes consistent with a VQ-VAE forward (NCHW images, a latent, and
    # a scalar vq loss produced upstream by the quantizer).
    pred = jax.random.normal(k1, (2, 4, 16, 16), dtype=jnp.float32)
    target = jax.random.normal(k2, (2, 4, 16, 16), dtype=jnp.float32)
    latent = jax.random.normal(k3, (2, 8, 4, 4), dtype=jnp.float32)
    vq_loss = jnp.abs(jax.random.normal(k4, (), dtype=jnp.float32))

    loss_fn = VQVAELoss(commitment_cost=0.25)

    # Force the Pallas reduction kernel (the auto path would use the plain-JAX
    # fast path for inputs this small).
    total_loss, components = loss_fn(pred, target, latent, vq_loss,
                                     use_pallas=True)
    total_loss = jax.block_until_ready(total_loss)
    components = jax.tree_util.tree_map(jax.block_until_ready, components)

    # Auto-dispatch path (tiny inputs -> plain-JAX fast path).
    total_auto, _ = loss_fn(pred, target, latent, vq_loss)
    total_auto = jax.block_until_ready(total_auto)

    # Reference check (plain JAX).
    ref_mse = jnp.mean((pred - target) ** 2)
    ref_total = ref_mse + vq_loss
    assert abs(float(components['mse']) - float(ref_mse)) < 1e-5
    assert abs(float(total_loss) - float(ref_total)) < 1e-5
    assert abs(float(components['total']) - float(ref_total)) < 1e-5
    assert abs(float(components['vq_loss']) - float(vq_loss)) < 1e-7
    assert abs(float(total_auto) - float(ref_total)) < 1e-5

    # Gradient through the Pallas path (custom_vjp).
    grad_fn = jax.jit(jax.grad(
        lambda p: vqvae_loss_forward(p, target, latent, vq_loss,
                                     use_pallas=True)[0]))
    g = jax.block_until_ready(grad_fn(pred))
    ref_g = 2.0 * (pred - target) / pred.size
    assert float(jnp.max(jnp.abs(g - ref_g))) < 1e-5

    print("KERNEL_OK")
</pallas_src>

<mosaic_0001>
module attributes {stable_mosaic.version = 11 : i64} {
  func.func @_sq_diff_kernel(%arg0: i32, %arg1: i32, %arg2: memref<16x128xf32, #tpu.memory_space<vmem>>, %arg3: memref<16x128xf32, #tpu.memory_space<vmem>>, %arg4: memref<8x128xf32, #tpu.memory_space<vmem>>) attributes {dimension_semantics = [#tpu.dimension_semantics<parallel>, #tpu.dimension_semantics<arbitrary>], iteration_bounds = array<i64: 1, 1>, scalar_prefetch = 0 : i64, scratch_operands = 0 : i64, tpu.core_type = #tpu.core_type<tc>, window_params = [{transform_indices = @transform_0, window_bounds = array<i64: 16, 128>}, {transform_indices = @transform_1, window_bounds = array<i64: 16, 128>}, {transform_indices = @transform_2, window_bounds = array<i64: 8, 128>}]} {
    %c0_i32 = arith.constant 0 : i32
    %0 = arith.cmpi eq, %arg1, %c0_i32 : i32
    %1 = arith.extui %0 : i1 to i32
    %c0_i32_0 = arith.constant 0 : i32
    %2 = arith.cmpi ne, %1, %c0_i32_0 : i32
    scf.if %2 {
      %cst_7 = arith.constant 0.000000e+00 : f32
      %16 = vector.broadcast %cst_7 : f32 to vector<8x128xf32>
      %c0_8 = arith.constant 0 : index
      %c0_9 = arith.constant 0 : index
      %17 = vector.load %arg4[%c0_8, %c0_9] : memref<8x128xf32, #tpu.memory_space<vmem>>, vector<8x128xf32>
      tpu.vector_store %arg4[%c0_8, %c0_9], %16 {strides = array<i32>} : memref<8x128xf32, #tpu.memory_space<vmem>>, vector<8x128xf32>,
    } else {
    }
    %c0_i32_1 = arith.constant 0 : i32
    %c16_i32 = arith.constant 16 : i32
    %3 = arith.muli %c0_i32_1, %c16_i32 : i32
    %4 = tpu.assume_multiple %3, 16 : i32
    %5 = arith.index_cast %4 : i32 to index
    %c0 = arith.constant 0 : index
    %6 = vector.load %arg2[%5, %c0] : memref<16x128xf32, #tpu.memory_space<vmem>>, vector<16x128xf32>
    %7 = arith.index_cast %4 : i32 to index
    %c0_2 = arith.constant 0 : index
    %8 = vector.load %arg3[%7, %c0_2] : memref<16x128xf32, #tpu.memory_space<vmem>>, vector<16x128xf32>
    %9 = arith.subf %6, %8 : vector<16x128xf32>
    %10 = arith.mulf %9, %9 : vector<16x128xf32>
    %c0_3 = arith.constant 0 : index
    %c0_4 = arith.constant 0 : index
    %11 = vector.load %arg4[%c0_3, %c0_4] : memref<8x128xf32, #tpu.memory_space<vmem>>, vector<8x128xf32>
    %12 = vector.shape_cast %10 : vector<16x128xf32> to vector<2x8x128xf32>
    %cst = arith.constant dense<0.000000e+00> : vector<8x128xf32>
    %13 = vector.multi_reduction <add>, %12, %cst [0] : vector<2x8x128xf32> to vector<8x128xf32>
    %14 = arith.addf %11, %13 : vector<8x128xf32>
    %c0_5 = arith.constant 0 : index
    %c0_6 = arith.constant 0 : index
    %15 = vector.load %arg4[%c0_5, %c0_6] : memref<8x128xf32, #tpu.memory_space<vmem>>, vector<8x128xf32>
    tpu.vector_store %arg4[%c0_5, %c0_6], %14 {strides = array<i32>} : memref<8x128xf32, #tpu.memory_space<vmem>>, vector<8x128xf32>,
    %c1_i32 = arith.constant 1 : i32
    return
  }
  func.func @transform_0(%arg0: i32, %arg1: i32) -> (i32, i32) {
    %c1_i32 = arith.constant 1 : i32
    %0 = arith.muli %arg0, %c1_i32 : i32
    %1 = arith.addi %0, %arg1 : i32
    %c0_i32 = arith.constant 0 : i32
    %c0_i32_0 = arith.constant 0 : i32
    return %1, %c0_i32 : i32, i32
  }
  func.func @transform_1(%arg0: i32, %arg1: i32) -> (i32, i32) {
    %c1_i32 = arith.constant 1 : i32
    %0 = arith.muli %arg0, %c1_i32 : i32
    %1 = arith.addi %0, %arg1 : i32
    %c0_i32 = arith.constant 0 : i32
    %c0_i32_0 = arith.constant 0 : i32
    return %1, %c0_i32 : i32, i32
  }
  func.func @transform_2(%arg0: i32, %arg1: i32) -> (i32, i32) {
    %c0_i32 = arith.constant 0 : i32
    %c0_i32_0 = arith.constant 0 : i32
    return %arg0, %c0_i32 : i32, i32
  }
}

</mosaic_0001>

<llo_original>
// kernel: vqvae_loss_forward.1
$region0: #{vqvae_loss_forward.1}
  #allocation0 [shape = 'u32[]', space=smem, size = 0x4, offset = 0x4, fixed_abs, tag = 'smem constant byte address 0x4 - core index']
  #allocation1 [shape = 'u32[144,128]{1,0:T(1,128)}', space=vmem, size = 0x12000, scoped, tag = 'internal scratch']
  %s0 = inlined_call_operand.vmem [shape: f32[16,128], index: 0, kind: input, shape index: {}]
  %s1 = inlined_call_operand.vmem [shape: f32[16,128], index: 1, kind: input, shape index: {}]
  %s2 = inlined_call_operand.vmem [shape: f32[8,128], index: 2, kind: output, shape index: {}]
  %s3 = sld [smem:[#allocation0]]
  $region22: #{vqvae_loss_forward.1} parent=0
    _
  %s5 = ssub.s32 1, %s3
  %s6 = scalar_select 0, %s5, %s3
  // Predicated region
  $region2: #{vqvae_loss_forward.1} parent=0 // pred_check
    _
  $region3: #{vqvae_loss_forward.1} parent=0 // pred_check_branch
    %8 = sbr.rel (0) target = $region5
  $region4: #{vqvae_loss_forward.1} parent=0 // pred_region
    %s9 = sadd.s32 0, 0
    %s10 = smul.u32 2, %s9
    %p11 = scmp.lt.s32.totalorder %s10, 1
    %s12 = scalar_select %p11, %s10, 1
    %s13 = smul.addr %s12, 8
    %s14 = scalar_lea.vmem %s0, %s13
    %s15 = sadd.s32 0, 0
    %s16 = smul.u32 2, %s15
  $region5: #{vqvae_loss_forward.1} parent=0 // pred_fallthru
    _
  // Predicated region
  $region6: #{vqvae_loss_forward.1} parent=0 // pred_check
    _
  $region7: #{vqvae_loss_forward.1} parent=0 // pred_check_branch
    %18 = sbr.rel (0) target = $region9
  $region8: #{vqvae_loss_forward.1} parent=0 // pred_region
    %s19 = sadd.s32 0, 0
    %s20 = smul.u32 2, %s19
    %p21 = scmp.lt.s32.totalorder %s20, 1
    %s22 = scalar_select %p21, %s20, 1
    %s23 = smul.addr %s22, 8
    %s24 = scalar_lea.vmem %s1, %s23
    %s25 = sadd.s32 0, 0
    %s26 = smul.u32 2, %s25
  $region9: #{vqvae_loss_forward.1} parent=0 // pred_fallthru
    _
  %s27 = sadd.s32 0, 0
  %s28 = smul.u32 2, %s27
  %p29 = scmp.lt.s32.totalorder %s28, 1
  %s30 = scalar_select %p29, %s28, 1
  %s31 = smul.addr %s30, 8
  %s32 = scalar_lea.vmem %s0, %s31
  %s33 = sadd.s32 0, 0
  %s34 = smul.u32 2, %s33
  %p35 = scmp.lt.s32.totalorder %s34, 1
  %s36 = scalar_select %p35, %s34, 1
  %s37 = smul.addr %s36, 8
  %s38 = scalar_lea.vmem %s1, %s37
  %s39 = sadd.s32 0, 0
  %s40 = smul.u32 2, %s39
  %p41 = scmp.lt.s32.totalorder %s40, 1
  %s42 = scalar_select %p41, %s40, 1
  %s43 = smul.addr %s42, 8
  %s44 = scalar_lea.vmem %s0, %s43
  %s45 = sadd.s32 0, 0
  %s46 = smul.u32 2, %s45
  %s47 = sadd.s32 0, 0
  %s48 = smul.u32 2, %s47
  %p49 = scmp.lt.s32.totalorder %s48, 1
  %s50 = scalar_select %p49, %s48, 1
  %s51 = smul.addr %s50, 8
  %s52 = scalar_lea.vmem %s1, %s51
  %s53 = sadd.s32 0, 0
  %s54 = smul.u32 2, %s53
  %p55 = scmp.eq.s32.totalorder 0, 0
  // Predicated region
  $region10: #{vqvae_loss_forward.1} parent=0 // pred_check
    %p56 = pneg %p55
  $region11: #{vqvae_loss_forward.1} parent=0 // pred_check_branch
    %58 = sbr.rel (%p56) target = $region13
  $region12: #{vqvae_loss_forward.1} parent=0 // pred_region
    %59 = vst [vmem:[%s2] sm:$0xff] 0.0
  $region13: #{vqvae_loss_forward.1} parent=0 // pred_fallthru
    _
  %v60 = vld [vmem:[%s44] sm:$0xff]
  %v61 = vld [vmem:[%s44 + $0x8] sm:$0xff]
  %v62 = vld [vmem:[%s52] sm:$0xff]
  %v63 = vld [vmem:[%s52 + $0x8] sm:$0xff]
  %v64 = vsub.f32 %v60, %v62
  %v65 = vsub.f32 %v61, %v63
  %v66 = vmul.f32 %v64, %v64
  %v67 = vmul.f32 %v65, %v65
  %v68 = vld [vmem:[%s2] sm:$0xff]
  %v69 = vadd.f32 %v66, %v67
  %v70 = vadd.f32 %v68, %v69
  %71 = vst [vmem:[%s2] sm:$0xff] %v70
  // Predicated region
  $region14: #{vqvae_loss_forward.1} parent=0 // pred_check
    _
  $region15: #{vqvae_loss_forward.1} parent=0 // pred_check_branch
    %73 = sbr.rel (0) target = $region17
  $region16: #{vqvae_loss_forward.1} parent=0 // pred_region
    _
  $region17: #{vqvae_loss_forward.1} parent=0 // pred_fallthru
    _
  // Predicated region
  $region18: #{vqvae_loss_forward.1} parent=0 // pred_check
    _
  $region19: #{vqvae_loss_forward.1} parent=0 // pred_check_branch
    %75 = sbr.rel (0) target = $region21
  $region20: #{vqvae_loss_forward.1} parent=0 // pred_region
    _
  $region21: #{vqvae_loss_forward.1} parent=0 // pred_fallthru
    _

</llo_original>
